<compile_context>
chip_gen: v7x
topology: tpu7x:2x2x1
jax: 0.10.0
libtpu: 0.0.40
codegen_flags: <defaults>
</compile_context>

<pallas_src>
import math

import jax
import jax.numpy as jnp
from jax.experimental import pallas as pl
from jax.experimental.pallas import tpu as pltpu


def _round_up(x, m):
    return ((x + m - 1) // m) * m


def _sublane_multiple(dtype):
    # 8 for 4-byte dtypes, 16 for 2-byte (bf16), 32 for 1-byte (int8).
    itemsize = jnp.dtype(dtype).itemsize
    return max(8, 32 // max(itemsize, 1))


def _identity_for_max(dtype):
    dtype = jnp.dtype(dtype)
    if jnp.issubdtype(dtype, jnp.floating):
        return float("-inf")
    if jnp.issubdtype(dtype, jnp.integer):
        return int(jnp.iinfo(dtype).min)
    if dtype == jnp.bool_:
        return False
    raise TypeError(f"unsupported dtype for max pooling: {dtype}")


def _vmem_params():
    """(per-input-tile budget, default scoped-VMEM limit, physical VMEM bytes)."""
    phys = 128 * 1024 * 1024
    try:
        phys = int(pltpu.get_tpu_info().vmem_capacity_bytes)
    except Exception:
        pass
    if phys <= 64 * 1024 * 1024:
        # v7x: 64 MiB physical / 32 MiB default scoped, ~3.2 TB/s HBM per TC.
        # Bigger tiles amortize the ~0.35us per-grid-step overhead.
        return 8 * 1024 * 1024, 32 * 1024 * 1024, phys
    # v5e / v6e: 128 MiB physical; stay safe for v5e's 16 MiB scoped default.
    return 4 * 1024 * 1024, 16 * 1024 * 1024, phys


def _make_kernel(n_valid, n_tile, needs_mask, identity):
    def kernel(x_ref, o_ref):
        # x_ref: (Bt, Nt, Dw) input tile.  o_ref: (Bt, Dw) output slab held
        # resident across the reduction grid axis (same block index for all k).
        k = pl.program_id(1)
        x = x_ref[...]
        if needs_mask:
            # Mask the reduction-axis tail (boundary block reads undefined
            # data past N) with the max identity.  Cheap VPU select.
            row = jax.lax.broadcasted_iota(jnp.int32, x.shape, 1)
            x = jnp.where(k * n_tile + row < n_valid,
                          x, jnp.asarray(identity, dtype=x.dtype))
        chunk_max = jnp.max(x, axis=1)

        @pl.when(k == 0)
        def _init():
            o_ref[...] = chunk_max

        @pl.when(k != 0)
        def _accumulate():
            o_ref[...] = jnp.maximum(o_ref[...], chunk_max)

    return kernel


def max_pool_dim_minus2(x, *, tile_bytes=None):
    """Max-reduce dim=-2 of x (rank >= 2), matching torch x.max(dim=-2).values."""
    if x.ndim < 2:
        raise ValueError("input must have rank >= 2")
    lead = x.shape[:-2]
    N, D = int(x.shape[-2]), int(x.shape[-1])
    if N == 0:
        raise ValueError("cannot max-pool over an empty dimension")
    B = int(math.prod(lead)) if lead else 1

    dtype = x.dtype
    itemsize = jnp.dtype(dtype).itemsize
    sub = _sublane_multiple(dtype)
    identity = _identity_for_max(dtype)

    budget, scoped_default, phys_vmem = _vmem_params()
    if tile_bytes is not None:
        budget = int(tile_bytes)

    x3 = x.reshape(B, N, D)

    # ---- Lane folding: D < 128 leaves vregs mostly empty and forces masked
    # stores.  Fold g consecutive pooled rows into the lane axis via a *free*
    # contiguous reshape; a tiny epilogue max over g finishes the reduction.
    fold = 1
    if D < 128 and N > 1:
        g_cap = min(max(1, 128 // max(D, 1)), N)
        for g in range(g_cap, 1, -1):
            if N % g == 0:
                fold = g
                break
    Nw, Dw = N // fold, D * fold
    if fold > 1:
        x3 = x3.reshape(B, Nw, Dw)

    Dpad = _round_up(Dw, 128)                          # lane padding in VMEM
    row_bytes = _round_up(Nw, sub) * Dpad * itemsize   # one batch row, padded

    split = 1
    if min(B, sub) * row_bytes <= budget:
        # Whole (folded) reduction axis fits in one tile: block many batch rows.
        Nt = Nw
        rows_budget = max(1, budget // row_bytes)
        if rows_budget >= B:
            Bt = B
            if B >= 2 * sub:
                # Keep >= 2 steps on the "parallel" axis so v7x megacore can
                # shard across both TensorCores (also deepens the pipeline).
                half = _round_up((B + 1) // 2, sub)
                if half < B:
                    Bt = half
        else:
            Bt = max(sub, (rows_budget // sub) * sub)
    else:
        # Large rows: chunk the reduction axis (trailing "arbitrary" grid axis).
        # Never pad B up to a sublane multiple: the leading dim of a 3-D input
        # block has no (8,128) constraint, and padding would add HBM traffic.
        Bt = min(B, sub)
        if B <= sub:
            # Single batch block: split the pooled axis into pseudo-batch rows
            # (free reshape) so both v7x TensorCores get work.
            s_min = max(2, -(-2 * sub // B))           # ceil(2*sub / B)
            s_cap = min(Nw // max(sub, 1), 8 * sub)
            for s in range(s_min, s_cap + 1):
                if Nw % s == 0:
                    split = s
                    break
            if split > 1:
                Nw //= split
                B *= split
                x3 = x3.reshape(B, Nw, Dw)
                Bt = min(B, sub)
        nt_budget = max(1, budget // (Bt * Dpad * itemsize))
        Nt = max(sub, (nt_budget // sub) * sub)
        Nt = min(Nt, Nw)

    grid = (pl.cdiv(B, Bt), pl.cdiv(Nw, Nt))
    needs_mask = (Nw % Nt) != 0
    kernel = _make_kernel(Nw, Nt, needs_mask, identity)

    # VMEM accounting on *padded* tile dims (2 input buffers + 2 output slabs).
    in_tile = Bt * _round_up(Nt, sub) * Dpad * itemsize
    out_tile = _round_up(Bt, sub) * Dpad * itemsize
    vmem_needed = 2 * in_tile + 2 * out_tile + (2 << 20)
    compiler_kwargs = dict(dimension_semantics=("parallel", "arbitrary"))
    if vmem_needed > scoped_default:
        compiler_kwargs["vmem_limit_bytes"] = int(
            min(vmem_needed, (phys_vmem * 3) // 4))

    cost = pl.CostEstimate(
        flops=B * Nw * Dw,
        transcendentals=0,
        bytes_accessed=(B * Nw * Dw + B * Dw) * itemsize,
    )

    out = pl.pallas_call(
        kernel,
        out_shape=jax.ShapeDtypeStruct((B, Dw), dtype),
        grid=grid,
        in_specs=[pl.BlockSpec((Bt, Nt, Dw), lambda b, k: (b, k, 0))],
        out_specs=pl.BlockSpec((Bt, Dw), lambda b, k: (b, 0)),
        compiler_params=pltpu.CompilerParams(**compiler_kwargs),
        cost_estimate=cost,
    )(x3)

    # Cheap epilogue reductions on the small kernel output (<< input traffic).
    if split > 1:
        out = out.reshape(B // split, split, Dw).max(axis=1)
    if fold > 1:
        out = out.reshape(out.shape[0], fold, D).max(axis=1)
    return out.reshape(*lead, D)


class MaxPoolModule:
    """JAX/Pallas equivalent of the PyTorch MaxPoolModule (no parameters)."""

    def __init__(self, pool_dim=-2):
        self.pool_dim = pool_dim

    def __call__(self, x):
        dim = self.pool_dim % x.ndim
        if dim == x.ndim - 1:
            # Pool the last axis via a free trailing-singleton reshape so the
            # same -2 kernel applies -- no HBM transpose.
            return max_pool_dim_minus2(x[..., None])[..., 0]
        if dim != x.ndim - 2:
            # TODO(synk): layout plumbing only -- moveaxis is a full HBM
            # transpose; a dedicated kernel variant could avoid it.
            x = jnp.moveaxis(x, dim, -2)
        return max_pool_dim_minus2(x)


if __name__ == "__main__":
    key = jax.random.PRNGKey(0)
    k1, k2, k3, k4, k5 = jax.random.split(key, 5)
    module = MaxPoolModule(pool_dim=-2)

    # Case 1: set-shaped input (batch=2, set size=8, hidden=32): lane-fold path.
    x1 = jax.random.normal(k1, (2, 8, 32), dtype=jnp.float32)
    out1 = jax.block_until_ready(module(x1))
    ref1 = jnp.max(x1, axis=-2)
    assert out1.shape == ref1.shape == (2, 32) and out1.dtype == x1.dtype
    assert jnp.allclose(out1, ref1), "mismatch (case 1)"

    # Case 2: non-aligned shapes, no pad copy.
    x2 = jax.random.normal(k2, (3, 5, 40), dtype=jnp.float32)
    out2 = jax.block_until_ready(module(x2))
    assert jnp.allclose(out2, jnp.max(x2, axis=-2)), "mismatch (case 2)"

    # Case 3: extra leading dims flattened into the batch-block axis.
    x3 = jax.random.normal(k3, (2, 4, 6, 32), dtype=jnp.float32)
    out3 = jax.block_until_ready(module(x3))
    assert out3.shape == (2, 4, 32)
    assert jnp.allclose(out3, jnp.max(x3, axis=-2)), "mismatch (case 3)"

    # Case 4: force the chunked path (reduction-axis tiling + in-kernel tail
    # mask + pseudo-batch split) with a tiny tile budget on a small array.
    x4 = jax.random.normal(k4, (3, 1000, 40), dtype=jnp.float32)
    out4 = jax.block_until_ready(max_pool_dim_minus2(x4, tile_bytes=64 * 1024))
    assert jnp.allclose(out4, jnp.max(x4, axis=-2)), "mismatch (case 4)"

    # Case 5: pool_dim=-1 routed through the same kernel via a free reshape.
    x5 = jax.random.normal(k5, (4, 33), dtype=jnp.float32)
    out5 = jax.block_until_ready(MaxPoolModule(pool_dim=-1)(x5))
    assert out5.shape == (4,)
    assert jnp.allclose(out5, jnp.max(x5, axis=-1)), "mismatch (case 5)"

    print("KERNEL_OK")
</pallas_src>

<mosaic_0001>
module attributes {stable_mosaic.version = 11 : i64} {
  func.func @kernel(%arg0: i32, %arg1: i32, %arg2: memref<2x2x128xf32, #tpu.memory_space<vmem>>, %arg3: memref<2x128xf32, #tpu.memory_space<vmem>>) attributes {dimension_semantics = [#tpu.dimension_semantics<parallel>, #tpu.dimension_semantics<arbitrary>], iteration_bounds = array<i64: 1, 1>, scalar_prefetch = 0 : i64, scratch_operands = 0 : i64, tpu.core_type = #tpu.core_type<tc>, window_params = [{transform_indices = @transform_0, window_bounds = array<i64: 2, 2, 128>}, {transform_indices = @transform_1, window_bounds = array<i64: 2, 128>}]} {
    %c0 = arith.constant 0 : index
    %c0_0 = arith.constant 0 : index
    %c0_1 = arith.constant 0 : index
    %0 = vector.load %arg2[%c0, %c0_0, %c0_1] : memref<2x2x128xf32, #tpu.memory_space<vmem>>, vector<2x2x128xf32>
    %cst = arith.constant dense<0xFF800000> : vector<2x128xf32>
    %1 = vector.multi_reduction <maximumf>, %0, %cst [1] : vector<2x2x128xf32> to vector<2x128xf32>
    %c0_i32 = arith.constant 0 : i32
    %2 = arith.cmpi eq, %arg1, %c0_i32 : i32
    %3 = arith.extui %2 : i1 to i32
    %c0_i32_2 = arith.constant 0 : i32
    %4 = arith.cmpi ne, %3, %c0_i32_2 : i32
    scf.if %4 {
      %c0_5 = arith.constant 0 : index
      %c0_6 = arith.constant 0 : index
      %8 = vector.load %arg3[%c0_5, %c0_6] : memref<2x128xf32, #tpu.memory_space<vmem>>, vector<2x128xf32>
      tpu.vector_store %arg3[%c0_5, %c0_6], %1 {strides = array<i32>} : memref<2x128xf32, #tpu.memory_space<vmem>>, vector<2x128xf32>,
    } else {
    }
    %c0_i32_3 = arith.constant 0 : i32
    %5 = arith.cmpi ne, %arg1, %c0_i32_3 : i32
    %6 = arith.extui %5 : i1 to i32
    %c0_i32_4 = arith.constant 0 : i32
    %7 = arith.cmpi ne, %6, %c0_i32_4 : i32
    scf.if %7 {
      %c0_5 = arith.constant 0 : index
      %c0_6 = arith.constant 0 : index
      %8 = vector.load %arg3[%c0_5, %c0_6] : memref<2x128xf32, #tpu.memory_space<vmem>>, vector<2x128xf32>
      %9 = arith.maximumf %8, %1 : vector<2x128xf32>
      %c0_7 = arith.constant 0 : index
      %c0_8 = arith.constant 0 : index
      %10 = vector.load %arg3[%c0_7, %c0_8] : memref<2x128xf32, #tpu.memory_space<vmem>>, vector<2x128xf32>
      tpu.vector_store %arg3[%c0_7, %c0_8], %9 {strides = array<i32>} : memref<2x128xf32, #tpu.memory_space<vmem>>, vector<2x128xf32>,
    } else {
    }
    return
  }
  func.func @transform_0(%arg0: i32, %arg1: i32) -> (i32, i32, i32) {
    %c0_i32 = arith.constant 0 : i32
    %c0_i32_0 = arith.constant 0 : i32
    return %arg0, %arg1, %c0_i32 : i32, i32, i32
  }
  func.func @transform_1(%arg0: i32, %arg1: i32) -> (i32, i32) {
    %c0_i32 = arith.constant 0 : i32
    %c0_i32_0 = arith.constant 0 : i32
    return %arg0, %c0_i32 : i32, i32
  }
}

</mosaic_0001>

<llo_original>
// kernel: tpu_custom_call.1
$region0: #{tpu_custom_call.1}
  #allocation0 [shape = 'u32[]', space=smem, size = 0x4, offset = 0x4, fixed_abs, tag = 'smem constant byte address 0x4 - core index']
  #allocation1 [shape = 'u32[144,128]{1,0:T(1,128)}', space=vmem, size = 0x12000, scoped, tag = 'internal scratch']
  %s0 = inlined_call_operand.hbm [shape: f32[2,2,128], index: 0, kind: input, shape index: {}]
  %s1 = inlined_call_operand.hbm [shape: f32[2,128], index: 1, kind: output, shape index: {}]
  %s2 = sld [smem:[#allocation0]]
  $region26: #{tpu_custom_call.1} parent=0
    _
  %s4 = ssub.s32 1, %s2
  %s5 = scalar_select 0, %s4, %s2
  $region1: #{tpu_custom_call.1} parent=0
    #allocation2 [shape = 'u8[2048]{0}', space=vmem, size = 0x800, scoped, tag = 'input window, operand 0, single buffered']
    #allocation3 [shape = 's32[1]{0}', space=sflag, size = 0x4, scoped, tag = 'scoped memory for tpu_custom_call.1']
    #allocation4 [shape = 's32[1]{0}', space=sflag, size = 0x4, scoped, tag = 'scoped memory for tpu_custom_call.1']
    #allocation5 [shape = 'u8[1024]{0}', space=vmem, size = 0x400, scoped, tag = 'output window, operand 0, single buffered']
    %6 = vsyncpa [#allocation3], 0
    %7 = vsyncpa [#allocation4], 0
    // Predicated region
    $region2: #{tpu_custom_call.1} parent=1 // pred_check
      _
    $region3: #{tpu_custom_call.1} parent=1 // pred_check_branch
      %9 = sbr.rel (0) target = $region5
    $region4: #{tpu_custom_call.1} parent=1 // pred_region
      %s11 = ssub.s32 64, 64
      %12 = vsyncadd [#allocation3], %s11
      %s13 = sshll.u32 [#allocation2], 4
      %s14 = int_to_ptr.vmem [resolvable:$true] %s13
      %19 = dma.hbm_to_vmem [thread:$0]  %s0, 64, %s14, [#allocation3], 32, 32, 2
    $region5: #{tpu_custom_call.1} parent=1 // pred_fallthru
      _
    // Predicated region
    $region6: #{tpu_custom_call.1} parent=1 // pred_check
      _
    $region7: #{tpu_custom_call.1} parent=1 // pred_check_branch
      %21 = sbr.rel (0) target = $region9
    $region8: #{tpu_custom_call.1} parent=1 // pred_region
      %22 = dma.done [#allocation3], 64
    $region9: #{tpu_custom_call.1} parent=1 // pred_fallthru
      _
    %v23 = vld [vmem:[#allocation2] sm:$0x3]
    %v24 = vld [vmem:[#allocation2 + $0x2] sm:$0x3]
    %vm25 = vcmask 1041408
    %v26 = vsel %vm25, %v23, -inf
    %v27 = vrot.slane %v26, 4
    %v28 = vmax.f32 %v26, %v27
    %v29 = vrot.slane %v28, 2
    %v30 = vmax.f32 %v28, %v29
    %v31 = vrot.slane %v30, 1
    %v32 = vmax.f32 %v30, %v31
    %v33 = vsel %vm25, %v24, -inf
    %v34 = vrot.slane %v33, 4
    %v35 = vmax.f32 %v33, %v34
    %v36 = vrot.slane %v35, 2
    %v37 = vmax.f32 %v35, %v36
    %v38 = vrot.slane %v37, 1
    %v39 = vmax.f32 %v37, %v38
    %p40 = scmp.eq.s32.totalorder 0, 0
    // Predicated region
    $region10: #{tpu_custom_call.1} parent=1 // pred_check
      %p41 = pneg %p40
    $region11: #{tpu_custom_call.1} parent=1 // pred_check_branch
      %43 = sbr.rel (%p41) target = $region13
    $region12: #{tpu_custom_call.1} parent=1 // pred_region
      %vm46 = vcmask 1041409
      %v47 = vsel %vm46, %v39, %v32
      %49 = vst [vmem:[#allocation5] sm:$0x3] %v47
    $region13: #{tpu_custom_call.1} parent=1 // pred_fallthru
      _
    %p50 = scmp.ne.s32.totalorder 0, 0
    // Predicated region
    $region14: #{tpu_custom_call.1} parent=1 // pred_check
      %p51 = pneg %p50
    $region15: #{tpu_custom_call.1} parent=1 // pred_check_branch
      %53 = sbr.rel (%p51) target = $region17
    $region16: #{tpu_custom_call.1} parent=1 // pred_region
      %v54 = vld [vmem:[#allocation5] sm:$0x3]
      %vm57 = vcmask 1041409
      %v58 = vsel %vm57, %v39, %v32
      %v60 = vmax.f32 %v54, %v58
      %61 = vst [vmem:[#allocation5] sm:$0x3] %v60
    $region17: #{tpu_custom_call.1} parent=1 // pred_fallthru
      _
    // Predicated region
    $region18: #{tpu_custom_call.1} parent=1 // pred_check
      _
    $region19: #{tpu_custom_call.1} parent=1 // pred_check_branch
      %63 = sbr.rel (0) target = $region21
    $region20: #{tpu_custom_call.1} parent=1 // pred_region
      %s65 = ssub.s32 32, 32
      %66 = vsyncadd [#allocation4], %s65
      %s68 = sshll.u32 [#allocation5], 4
      %s69 = int_to_ptr.vmem [resolvable:$true] %s68
      %71 = dma.vmem_to_hbm [thread:$0]  %s69, 32, %s1, [#allocation4]
    $region21: #{tpu_custom_call.1} parent=1 // pred_fallthru
      _
    // Predicated region
    $region22: #{tpu_custom_call.1} parent=1 // pred_check
      _
    $region23: #{tpu_custom_call.1} parent=1 // pred_check_branch
      %73 = sbr.rel (0) target = $region25
    $region24: #{tpu_custom_call.1} parent=1 // pred_region
      %74 = dma.done [#allocation4], 32
    $region25: #{tpu_custom_call.1} parent=1 // pred_fallthru
      _
    %75 = vsyncpa [#allocation3], 1
    %76 = vsyncpa [#allocation4], 1

</llo_original>
